<compile_context>
chip_gen: v5e
topology: v5e:2x2
jax: 0.10.0
libtpu: 0.0.40
codegen_flags: <defaults>
</compile_context>

<pallas_src>
import jax
import jax.numpy as jnp
from jax.experimental import pallas as pl
from jax.experimental.pallas import tpu as pltpu

LANES = 128                               # vreg lane count (min lane width)
TARGET_BLOCK_BYTES = 4 * 1024 * 1024      # ~4 MiB per block (v6e/v7x sweet spot)
SPLIT_THRESHOLD_BYTES = 4 * 1024 * 1024   # force >= 2 grid blocks above this (v7x megacore)
VMEM_LIMIT_BYTES = 32 * 1024 * 1024       # 2 arrays x 2 buffers x 4 MiB = 16 MiB + headroom


def _sublane_packing(dtype) -> int:
    """Sublane packing factor for the dtype (rows per vreg sublane tile)."""
    itemsize = jnp.dtype(dtype).itemsize
    if itemsize == 2:
        return 16
    if itemsize == 1:
        return 32
    return 8


def _sine_kernel(x_ref, o_ref):
    # Elementwise sine on the current VMEM tile.  Compute in f32 (accurate
    # range reduction even for bf16 I/O), cast back to the output dtype.
    # (On v6e/v7x bf16 compute could ~2x VALU throughput, but f32 keeps
    # bit-accuracy with jnp.sin/torch.sin across all chips.)
    x = x_ref[...]
    o_ref[...] = jnp.sin(x.astype(jnp.float32)).astype(o_ref.dtype)


def _sine_2d(x2d: jax.Array) -> jax.Array:
    """Run the Pallas kernel on a lane-dense (rows, width) slab."""
    rows, width = x2d.shape
    dtype = x2d.dtype
    itemsize = jnp.dtype(dtype).itemsize
    sub = _sublane_packing(dtype)

    # Row-tile sized so one block is ~TARGET_BLOCK_BYTES, sublane-aligned.
    target_rows = max(sub, (TARGET_BLOCK_BYTES // (width * itemsize)) // sub * sub)

    total_bytes = rows * width * itemsize
    # On v7x the single "parallel" grid axis only shards across both
    # TensorCores if there are >= 2 grid steps; force a split on big slabs.
    want_split = total_bytes > SPLIT_THRESHOLD_BYTES and rows >= 2 * sub

    if rows <= target_rows and not want_split:
        tile_rows = rows              # full-extent block (legal even if rows % sub != 0)
    else:
        tile_rows = min(target_rows, rows)
        if want_split:
            # Largest sublane-aligned tile that still yields >= 2 grid steps.
            half = max(sub, (pl.cdiv(rows, 2) // sub) * sub)
            tile_rows = min(tile_rows, half)
        tile_rows = max(sub, (tile_rows // sub) * sub)
    grid = (pl.cdiv(rows, tile_rows),)    # partial last block handled by the pipeline

    n = rows * width
    cost = pl.CostEstimate(
        flops=0,
        transcendentals=n,
        bytes_accessed=2 * n * itemsize,
    )

    return pl.pallas_call(
        _sine_kernel,
        out_shape=jax.ShapeDtypeStruct((rows, width), dtype),
        grid=grid,
        in_specs=[pl.BlockSpec((tile_rows, width), lambda i: (i, 0))],
        out_specs=pl.BlockSpec((tile_rows, width), lambda i: (i, 0)),
        compiler_params=pltpu.CompilerParams(
            dimension_semantics=("parallel",),
            vmem_limit_bytes=VMEM_LIMIT_BYTES,
        ),
        cost_estimate=cost,
    )(x2d)


def sine(x: jax.Array) -> jax.Array:
    """Elementwise sin(x); matches torch.sin (floats keep dtype, ints promote)."""
    orig_shape = x.shape

    # torch.sin promotes integer inputs to float.
    if not jnp.issubdtype(x.dtype, jnp.floating):
        x = x.astype(jnp.float32)

    flat = x.reshape(-1)
    n = flat.shape[0]
    if n == 0:
        return flat.reshape(orig_shape)

    # 128-aligned prefix goes through the kernel; the <128-element tail (rare
    # for NN activations) is computed directly -- no pad/slice HBM round-trip.
    n_aligned = (n // LANES) * LANES
    if n_aligned == 0:
        return jnp.sin(flat).reshape(orig_shape)

    # Widest lane-dense slab width that divides the aligned element count.
    width = LANES
    for w in (1024, 512, 256):
        if n_aligned % w == 0:
            width = w
            break
    rows = n_aligned // width

    head = _sine_2d(flat[:n_aligned].reshape(rows, width)).reshape(-1)

    if n_aligned == n:
        out_flat = head
    else:
        tail = jnp.sin(flat[n_aligned:])
        out_flat = jnp.concatenate([head, tail])
    return out_flat.reshape(orig_shape)


if __name__ == "__main__":
    key = jax.random.PRNGKey(0)

    # Small NCHW-style input consistent with typical usage of the activation.
    x = jax.random.normal(key, (2, 4, 16, 16), dtype=jnp.float32)
    y = sine(x)
    jax.block_until_ready(y)
    assert y.shape == x.shape and y.dtype == x.dtype
    assert jnp.allclose(y, jnp.sin(x), atol=1e-6, rtol=1e-6)

    # Shape NOT a multiple of 128 and smaller than one vreg row (tail-only path).
    x2 = jax.random.normal(jax.random.PRNGKey(1), (3, 5, 7), dtype=jnp.float32)
    y2 = sine(x2)
    jax.block_until_ready(y2)
    assert jnp.allclose(y2, jnp.sin(x2), atol=1e-6, rtol=1e-6)

    # Shape with a 128-aligned prefix plus a small tail (prefix-kernel + tail path).
    x3 = jax.random.normal(jax.random.PRNGKey(2), (2, 130), dtype=jnp.float32)
    y3 = sine(x3)
    jax.block_until_ready(y3)
    assert jnp.allclose(y3, jnp.sin(x3), atol=1e-6, rtol=1e-6)

    # bf16 input (exercises 16-row sublane packing; f32 compute inside the kernel).
    x4 = jax.random.normal(jax.random.PRNGKey(3), (8, 256), dtype=jnp.bfloat16)
    y4 = sine(x4)
    jax.block_until_ready(y4)
    assert y4.dtype == jnp.bfloat16
    assert jnp.allclose(y4.astype(jnp.float32),
                        jnp.sin(x4.astype(jnp.float32)), atol=2e-2, rtol=2e-2)

    # Medium slab (> 4 MiB) to exercise the multi-block / megacore-split path.
    x5 = jax.random.normal(jax.random.PRNGKey(4), (2048, 1024), dtype=jnp.float32)
    y5 = sine(x5)
    jax.block_until_ready(y5)
    assert jnp.allclose(y5, jnp.sin(x5), atol=1e-6, rtol=1e-6)

    print("KERNEL_OK")
</pallas_src>

<mosaic_0001>
module attributes {stable_mosaic.version = 11 : i64} {
  func.func @_sine_kernel(%arg0: i32, %arg1: memref<2x1024xf32, #tpu.memory_space<vmem>>, %arg2: memref<2x1024xf32, #tpu.memory_space<vmem>>) attributes {dimension_semantics = [#tpu.dimension_semantics<parallel>], iteration_bounds = array<i64: 1>, scalar_prefetch = 0 : i64, scratch_operands = 0 : i64, tpu.core_type = #tpu.core_type<tc>, window_params = [{transform_indices = @transform_0, window_bounds = array<i64: 2, 1024>}, {transform_indices = @transform_1, window_bounds = array<i64: 2, 1024>}]} {
    %c0 = arith.constant 0 : index
    %c0_0 = arith.constant 0 : index
    %0 = vector.load %arg1[%c0, %c0_0] : memref<2x1024xf32, #tpu.memory_space<vmem>>, vector<2x1024xf32>
    %1 = math.sin %0 : vector<2x1024xf32>
    %c0_1 = arith.constant 0 : index
    %c0_2 = arith.constant 0 : index
    %2 = vector.load %arg2[%c0_1, %c0_2] : memref<2x1024xf32, #tpu.memory_space<vmem>>, vector<2x1024xf32>
    tpu.vector_store %arg2[%c0_1, %c0_2], %1 {strides = array<i32>} : memref<2x1024xf32, #tpu.memory_space<vmem>>, vector<2x1024xf32>,
    return
  }
  func.func @transform_0(%arg0: i32) -> (i32, i32) {
    %c0_i32 = arith.constant 0 : i32
    %c0_i32_0 = arith.constant 0 : i32
    return %arg0, %c0_i32 : i32, i32
  }
  func.func @transform_1(%arg0: i32) -> (i32, i32) {
    %c0_i32 = arith.constant 0 : i32
    %c0_i32_0 = arith.constant 0 : i32
    return %arg0, %c0_i32 : i32, i32
  }
}

</mosaic_0001>

<llo_original>
// kernel: tpu_custom_call.1
$region0: #{tpu_custom_call.1}
  #allocation0 [shape = 'u32[]', space=smem, size = 0x4, offset = 0x4, fixed_abs, tag = 'smem constant byte address 0x4 - core index']
  #allocation1 [shape = 'u32[72,128]{1,0:T(1,128)}', space=vmem, size = 0x9000, scoped, tag = 'internal scratch']
  %s0 = inlined_call_operand.hbm [shape: f32[2,1024], index: 0, kind: input, shape index: {}]
  %s1 = inlined_call_operand.hbm [shape: f32[2,1024], index: 1, kind: output, shape index: {}]
  %s2 = sld [smem:[#allocation0]]
  $region18: #{tpu_custom_call.1} parent=0
    _
  %s4 = ssub.s32 1, %s2
  %s5 = scalar_select 0, %s4, %s2
  $region1: #{tpu_custom_call.1} parent=0
    #allocation2 [shape = 'u8[8192]{0}', space=vmem, size = 0x2000, scoped, tag = 'input window, operand 0, single buffered']
    #allocation3 [shape = 's32[1]{0}', space=sflag, size = 0x4, scoped, tag = 'scoped memory for tpu_custom_call.1']
    #allocation4 [shape = 's32[1]{0}', space=sflag, size = 0x4, scoped, tag = 'scoped memory for tpu_custom_call.1']
    #allocation5 [shape = 'u8[8192]{0}', space=vmem, size = 0x2000, scoped, tag = 'output window, operand 0, single buffered']
    %6 = vsyncpa [#allocation3], 0
    %7 = vsyncpa [#allocation4], 0
    // Predicated region
    $region2: #{tpu_custom_call.1} parent=1 // pred_check
      _
    $region3: #{tpu_custom_call.1} parent=1 // pred_check_branch
      %9 = sbr.rel (0) target = $region5
    $region4: #{tpu_custom_call.1} parent=1 // pred_region
      %11 = vsyncadd [#allocation3], 0
      %s13 = sshll.u32 %s0, 4
      %s14 = int_to_ptr.hbm [resolvable:$true] %s13
      %s15 = sshll.u32 [#allocation2], 4
      %s16 = int_to_ptr.vmem [resolvable:$true] %s15
      %18 = dma.hbm_to_vmem [thread:$0]  %s14, 256, %s16, [#allocation3]
    $region5: #{tpu_custom_call.1} parent=1 // pred_fallthru
      _
    // Predicated region
    $region6: #{tpu_custom_call.1} parent=1 // pred_check
      _
    $region7: #{tpu_custom_call.1} parent=1 // pred_check_branch
      %20 = sbr.rel (0) target = $region9
    $region8: #{tpu_custom_call.1} parent=1 // pred_region
      %22 = dma.done [#allocation3], 256
    $region9: #{tpu_custom_call.1} parent=1 // pred_fallthru
      _
    %v23 = vld [vmem:[#allocation2] sm:$0xff]
    %v24 = vld [vmem:[#allocation2 + $0x8] sm:$0xff]
    %v25 = vand.u32 2147483647, %v23
    %vm26 = vcmp.le.f32.partialorder %v25, 0.7853982
    %vm27 = vcmp.lt.s32.totalorder %v23, 0
    %v28 = vand.u32 %v23, 2139095040
    %v29 = vshrl.u32 %v28, 23
    %v30 = vsub.s32 %v29, 127
    %v31 = vand.u32 2147483647, %v23
    %v32 = vand.u32 %v31, 8388607
    %v33 = vor.u32 %v32, 8388608
    %v34 = vsub.s32 0, %v33
    %v35 = vadd.s32 %v30, 1
    %vm36 = vcmp.gt.s32.totalorder %v35, 0
    %v37 = vsel %vm36, %v35, 0
    %v38 = vshrl.u32 %v37, 5
    %v39 = vand.u32 %v37, 31
    %v40 = vsub.s32 32, %v39
    %v41 = vshrl.u32 683565275, %v40
    %v42 = vshll.u32 683565275, %v39
    %v43 = vshrl.u32 2475754826, %v40
    %v44 = vor.u32 %v42, %v43
    %v45 = vshll.u32 2475754826, %v39
    %v46 = vshrl.u32 2131351028, %v40
    %v47 = vor.u32 %v45, %v46
    %v48 = vshll.u32 2131351028, %v39
    %v49 = vshrl.u32 2102212464, %v40
    %v50 = vor.u32 %v48, %v49
    %v51 = vshll.u32 2102212464, %v39
    %v52 = vshrl.u32 920167782, %v40
    %v53 = vor.u32 %v51, %v52
    %v54 = vshll.u32 920167782, %v39
    %v55 = vshrl.u32 1326507024, %v40
    %v56 = vor.u32 %v54, %v55
    %vm57 = vcmp.lt.s32.totalorder %v38, 1
    %vm58 = vcmp.lt.s32.totalorder %v38, 2
    %vm59 = vcmp.lt.s32.totalorder %v38, 3
    %vm60 = vcmp.lt.s32.totalorder %v38, 4
    %v61 = vsel %vm57, %v41, %v44
    %v62 = vsel %vm60, %v50, 2102212464
    %v63 = vsel %vm59, %v47, %v62
    %v64 = vsel %vm58, %v61, %v63
    %v65 = vsel %vm57, %v44, %v47
    %v66 = vsel %vm60, %v53, 920167782
    %v67 = vsel %vm59, %v50, %v66
    %v68 = vsel %vm58, %v65, %v67
    %v69 = vsel %vm57, %v47, %v50
    %v70 = vsel %vm60, %v56, 1326507024
    %v71 = vsel %vm59, %v53, %v70
    %v72 = vsel %vm58, %v69, %v71
    %v73 = vshll.u32 %v33, 8
    %v74 = vand.u32 %v73, 65535
    %v75 = vshrl.u32 %v73, 16
    %v76 = vand.u32 %v72, 65535
    %v77 = vshrl.u32 %v72, 16
    %v78 = vmul.u32 %v74, %v76
    %v79 = vmul.u32 %v74, %v77
    %v80 = vmul.u32 %v75, %v76
    %v81 = vmul.u32 %v75, %v77
    %v82 = vshll.u32 %v79, 16
    %v83 = vshrl.u32 %v79, 16
    %v84 = vshll.u32 %v80, 16
    %v85 = vshrl.u32 %v80, 16
    %vm86 = vc.u32 %v78, %v82
    %v87 = vsel %vm86, 1, 0
    %v88 = vadd.s32 %v78, %v82
    %v89 = vadd.s32 %v81, %v87
    %vm90 = vc.u32 %v88, %v84
    %v91 = vsel %vm90, 1, 0
    %v92 = vadd.s32 %v88, %v84
    %v93 = vadd.s32 %v89, %v91
    %v94 = vadd.s32 %v93, %v83
    %v95 = vadd.s32 %v94, %v85
    %v96 = vand.u32 %v73, 65535
    %v97 = vshrl.u32 %v73, 16
    %v98 = vand.u32 %v68, 65535
    %v99 = vshrl.u32 %v68, 16
    %v100 = vmul.u32 %v96, %v98
    %v101 = vmul.u32 %v96, %v99
    %v102 = vmul.u32 %v97, %v98
    %v103 = vmul.u32 %v97, %v99
    %v104 = vshll.u32 %v101, 16
    %v105 = vshrl.u32 %v101, 16
    %v106 = vshll.u32 %v102, 16
    %v107 = vshrl.u32 %v102, 16
    %vm108 = vc.u32 %v100, %v104
    %v109 = vsel %vm108, 1, 0
    %v110 = vadd.s32 %v100, %v104
    %v111 = vadd.s32 %v103, %v109
    %vm112 = vc.u32 %v110, %v106
    %v113 = vsel %vm112, 1, 0
    %v114 = vadd.s32 %v110, %v106
    %v115 = vadd.s32 %v111, %v113
    %v116 = vadd.s32 %v115, %v105
    %v117 = vadd.s32 %v116, %v107
    %v118 = vmul.u32 %v73, %v64
    %v119 = vadd.s32 %v95, %v114
    %vm120 = vc.u32 %v95, %v114
    %v121 = vadd.s32 %v117, 1
    %v122 = vsel %vm120, %v121, %v117
    %v123 = vadd.s32 %v118, %v122
    %v124 = vadd.s32 %v123, 536870912
    %v125 = vshrl.u32 %v124, 30
    %v126 = vshll.u32 %v125, 30
    %v127 = vsub.s32 %v123, %v126
    %vm128 = vcmp.lt.s32.totalorder %v127, 0
    %v129 = vsub.s32 0, %v127
    %v130 = vsel %vm128, %v129, %v127
    %v131 = vclz %v130
    %v132 = vsub.s32 %v131, 2
    %vm133 = vcmp.gt.s32.totalorder 0, %v132
    %v134 = vsel %vm133, 0, %v132
    %v135 = vsub.s32 32, %v134
    %v136 = vshll.u32 %v127, %v134
    %v137 = vshrl.u32 %v119, %v135
    %v138 = vor.u32 %v136, %v137
    %v139 = vsub.s32 4294967266, %v134
    %v140 = vadd.s32 %v139, 127
    %v141 = vshll.u32 %v140, 23
    %v142 = vor.u32 4788187, %v141
    %v143 = vand.u32 2147483647, %v142
    %v145 = vcvt.s32.f32 %v138
    %v146 = vmul.f32 %v145, %v143
    %v147 = vxor.u32 %v146, 2147483648
    %v148 = vsel %vm27, %v147, %v146
    %v149 = vsub.s32 4, %v125
    %v150 = vsel %vm27, %v149, %v125
    %v151 = vsel %vm26, %v23, %v148
    %v152 = vsel %vm26, 0, %v150
    %v153 = vmul.f32 %v151, %v151
    %v154 = vmul.f32 %v153, -0.001358992
    %v155 = vadd.f32 %v154, 0.041655596
    %v156 = vmul.f32 %v153, %v155
    %v157 = vadd.f32 %v156, -0.4999988
    %v158 = vmul.f32 %v153, %v157
    %v159 = vadd.f32 1.0, %v158
    %v160 = vmul.f32 %v151, %v151
    %v161 = vmul.f32 %v160, -0.00019511016
    %v162 = vadd.f32 %v161, 0.008332121
    %v163 = vmul.f32 %v160, %v162
    %v164 = vadd.f32 %v163, -0.16666654
    %v165 = vmul.f32 %v160, %v164
    %v166 = vadd.f32 %v165, 1.0
    %v167 = vmul.f32 %v166, %v151
    %vm168 = vweird.f32 %v23
    %v169 = vadd.s32 %v152, 3
    %v170 = vand.u32 %v169, 3
    %vm171 = vcmp.lt.s32.totalorder %v170, 2
    %vm172 = vcmp.eq.s32.totalorder %v170, 0
    %v173 = vxor.u32 %v167, 2147483648
    %v174 = vsel %vm172, %v159, %v173
    %vm175 = vcmp.eq.s32.totalorder %v170, 2
    %v176 = vxor.u32 %v159, 2147483648
    %v177 = vsel %vm175, %v176, %v167
    %v178 = vsel %vm171, %v174, %v177
    %v179 = vsel %vm168, nan, %v178
    %v180 = vand.u32 2147483647, %v24
    %vm181 = vcmp.le.f32.partialorder %v180, 0.7853982
    %vm182 = vcmp.lt.s32.totalorder %v24, 0
    %v183 = vand.u32 %v24, 2139095040
    %v184 = vshrl.u32 %v183, 23
    %v185 = vsub.s32 %v184, 127
    %v186 = vand.u32 2147483647, %v24
    %v187 = vand.u32 %v186, 8388607
    %v188 = vor.u32 %v187, 8388608
    %v189 = vsub.s32 0, %v188
    %v190 = vadd.s32 %v185, 1
    %vm191 = vcmp.gt.s32.totalorder %v190, 0
    %v192 = vsel %vm191, %v190, 0
    %v193 = vshrl.u32 %v192, 5
    %v194 = vand.u32 %v192, 31
    %v195 = vsub.s32 32, %v194
    %v196 = vshrl.u32 683565275, %v195
    %v197 = vshll.u32 683565275, %v194
    %v198 = vshrl.u32 2475754826, %v195
    %v199 = vor.u32 %v197, %v198
    %v200 = vshll.u32 2475754826, %v194
    %v201 = vshrl.u32 2131351028, %v195
    %v202 = vor.u32 %v200, %v201
    %v203 = vshll.u32 2131351028, %v194
    %v204 = vshrl.u32 2102212464, %v195
    %v205 = vor.u32 %v203, %v204
    %v206 = vshll.u32 2102212464, %v194
    %v207 = vshrl.u32 920167782, %v195
    %v208 = vor.u32 %v206, %v207
    %v209 = vshll.u32 920167782, %v194
    %v210 = vshrl.u32 1326507024, %v195
    %v211 = vor.u32 %v209, %v210
    %vm212 = vcmp.lt.s32.totalorder %v193, 1
    %vm213 = vcmp.lt.s32.totalorder %v193, 2
    %vm214 = vcmp.lt.s32.totalorder %v193, 3
    %vm215 = vcmp.lt.s32.totalorder %v193, 4
    %v216 = vsel %vm212, %v196, %v199
    %v217 = vsel %vm215, %v205, 2102212464
    %v218 = vsel %vm214, %v202, %v217
    %v219 = vsel %vm213, %v216, %v218
    %v220 = vsel %vm212, %v199, %v202
    %v221 = vsel %vm215, %v208, 920167782
    %v222 = vsel %vm214, %v205, %v221
    %v223 = vsel %vm213, %v220, %v222
    %v224 = vsel %vm212, %v202, %v205
    %v225 = vsel %vm215, %v211, 1326507024
    %v226 = vsel %vm214, %v208, %v225
    %v227 = vsel %vm213, %v224, %v226
    %v228 = vshll.u32 %v188, 8
    %v229 = vand.u32 %v228, 65535
    %v230 = vshrl.u32 %v228, 16
    %v231 = vand.u32 %v227, 65535
    %v232 = vshrl.u32 %v227, 16
    %v233 = vmul.u32 %v229, %v231
    %v234 = vmul.u32 %v229, %v232
    %v235 = vmul.u32 %v230, %v231
    %v236 = vmul.u32 %v230, %v232
    %v237 = vshll.u32 %v234, 16
    %v238 = vshrl.u32 %v234, 16
    %v239 = vshll.u32 %v235, 16
    %v240 = vshrl.u32 %v235, 16
    %vm241 = vc.u32 %v233, %v237
    %v242 = vsel %vm241, 1, 0
    %v243 = vadd.s32 %v233, %v237
    %v244 = vadd.s32 %v236, %v242
    %vm245 = vc.u32 %v243, %v239
    %v246 = vsel %vm245, 1, 0
    %v247 = vadd.s32 %v243, %v239
    %v248 = vadd.s32 %v244, %v246
    %v249 = vadd.s32 %v248, %v238
    %v250 = vadd.s32 %v249, %v240
    %v251 = vand.u32 %v228, 65535
    %v252 = vshrl.u32 %v228, 16
    %v253 = vand.u32 %v223, 65535
    %v254 = vshrl.u32 %v223, 16
    %v255 = vmul.u32 %v251, %v253
    %v256 = vmul.u32 %v251, %v254
    %v257 = vmul.u32 %v252, %v253
    %v258 = vmul.u32 %v252, %v254
    %v259 = vshll.u32 %v256, 16
    %v260 = vshrl.u32 %v256, 16
    %v261 = vshll.u32 %v257, 16
    %v262 = vshrl.u32 %v257, 16
    %vm263 = vc.u32 %v255, %v259
    %v264 = vsel %vm263, 1, 0
    %v265 = vadd.s32 %v255, %v259
    %v266 = vadd.s32 %v258, %v264
    %vm267 = vc.u32 %v265, %v261
    %v268 = vsel %vm267, 1, 0
    %v269 = vadd.s32 %v265, %v261
    %v270 = vadd.s32 %v266, %v268
    %v271 = vadd.s32 %v270, %v260
    %v272 = vadd.s32 %v271, %v262
    %v273 = vmul.u32 %v228, %v219
    %v274 = vadd.s32 %v250, %v269
    %vm275 = vc.u32 %v250, %v269
    %v276 = vadd.s32 %v272, 1
    %v277 = vsel %vm275, %v276, %v272
    %v278 = vadd.s32 %v273, %v277
    %v279 = vadd.s32 %v278, 536870912
    %v280 = vshrl.u32 %v279, 30
    %v281 = vshll.u32 %v280, 30
    %v282 = vsub.s32 %v278, %v281
    %vm283 = vcmp.lt.s32.totalorder %v282, 0
    %v284 = vsub.s32 0, %v282
    %v285 = vsel %vm283, %v284, %v282
    %v286 = vclz %v285
    %v287 = vsub.s32 %v286, 2
    %vm288 = vcmp.gt.s32.totalorder 0, %v287
    %v289 = vsel %vm288, 0, %v287
    %v290 = vsub.s32 32, %v289
    %v291 = vshll.u32 %v282, %v289
    %v292 = vshrl.u32 %v274, %v290
    %v293 = vor.u32 %v291, %v292
    %v294 = vsub.s32 4294967266, %v289
    %v295 = vadd.s32 %v294, 127
    %v296 = vshll.u32 %v295, 23
    %v297 = vor.u32 4788187, %v296
    %v298 = vand.u32 2147483647, %v297
    %v300 = vcvt.s32.f32 %v293
    %v301 = vmul.f32 %v300, %v298
    %v302 = vxor.u32 %v301, 2147483648
    %v303 = vsel %vm182, %v302, %v301
    %v304 = vsub.s32 4, %v280
    %v305 = vsel %vm182, %v304, %v280
    %v306 = vsel %vm181, %v24, %v303
    %v307 = vsel %vm181, 0, %v305
    %v308 = vmul.f32 %v306, %v306
    %v309 = vmul.f32 %v308, -0.001358992
    %v310 = vadd.f32 %v309, 0.041655596
    %v311 = vmul.f32 %v308, %v310
    %v312 = vadd.f32 %v311, -0.4999988
    %v313 = vmul.f32 %v308, %v312
    %v314 = vadd.f32 1.0, %v313
    %v315 = vmul.f32 %v306, %v306
    %v316 = vmul.f32 %v315, -0.00019511016
    %v317 = vadd.f32 %v316, 0.008332121
    %v318 = vmul.f32 %v315, %v317
    %v319 = vadd.f32 %v318, -0.16666654
    %v320 = vmul.f32 %v315, %v319
    %v321 = vadd.f32 %v320, 1.0
    %v322 = vmul.f32 %v321, %v306
    %vm323 = vweird.f32 %v24
    %v324 = vadd.s32 %v307, 3
    %v325 = vand.u32 %v324, 3
    %vm326 = vcmp.lt.s32.totalorder %v325, 2
    %vm327 = vcmp.eq.s32.totalorder %v325, 0
    %v328 = vxor.u32 %v322, 2147483648
    %v329 = vsel %vm327, %v314, %v328
    %vm330 = vcmp.eq.s32.totalorder %v325, 2
    %v331 = vxor.u32 %v314, 2147483648
    %v332 = vsel %vm330, %v331, %v322
    %v333 = vsel %vm326, %v329, %v332
    %v334 = vsel %vm323, nan, %v333
    %335 = vst [vmem:[#allocation5] sm:$0xff] %v179
    %336 = vst [vmem:[#allocation5 + $0x8] sm:$0xff] %v334
    // Predicated region
    $region10: #{tpu_custom_call.1} parent=1 // pred_check
      _
    $region11: #{tpu_custom_call.1} parent=1 // pred_check_branch
      %338 = sbr.rel (0) target = $region13
    $region12: #{tpu_custom_call.1} parent=1 // pred_region
      %340 = vsyncadd [#allocation4], 0
      %s342 = sshll.u32 [#allocation5], 4
      %s343 = int_to_ptr.vmem [resolvable:$true] %s342
      %s344 = sshll.u32 %s1, 4
      %s345 = int_to_ptr.hbm [resolvable:$true] %s344
      %347 = dma.vmem_to_hbm [thread:$0]  %s343, 256, %s345, [#allocation4]
    $region13: #{tpu_custom_call.1} parent=1 // pred_fallthru
      _
    // Predicated region
    $region14: #{tpu_custom_call.1} parent=1 // pred_check
      _
    $region15: #{tpu_custom_call.1} parent=1 // pred_check_branch
      %349 = sbr.rel (0) target = $region17
    $region16: #{tpu_custom_call.1} parent=1 // pred_region
      %351 = dma.done [#allocation4], 256
    $region17: #{tpu_custom_call.1} parent=1 // pred_fallthru
      _
    %352 = vsyncpa [#allocation3], 1
    %353 = vsyncpa [#allocation4], 1

</llo_original>
